<compile_context>
chip_gen: v7x
topology: tpu7x:2x2x1
jax: 0.10.0
libtpu: 0.0.40
codegen_flags: <defaults>
</compile_context>

<pallas_src>
from functools import partial

import numpy as np
import jax
import jax.numpy as jnp
from jax import lax
from jax.experimental import pallas as pl
from jax.experimental.pallas import tpu as pltpu


def _round_up(x: int, m: int) -> int:
    return (x + m - 1) // m * m


def _contrastive_tri_kernel(ii_ref, jj_ref,
                            emb_i_ref, emb_j_ref, sqc_ref, sqr_ref,
                            labc_ref, labr_ref, out_ref, *scratch,
                            margin, batch, tile, single_k, has_pad):
    t = pl.program_id(0)
    k = pl.program_id(1)
    nk = pl.num_programs(1)

    bi = ii_ref[t]          # row block index (scalar, SMEM)
    bj = jj_ref[t]          # col block index (scalar, SMEM)

    # MXU: contract the last (embed) axis of both chunks (no in-kernel
    # transpose); accumulate in f32 regardless of the operand dtype.
    part = lax.dot_general(
        emb_i_ref[...], emb_j_ref[...],
        dimension_numbers=(((1,), (1,)), ((), ())),
        preferred_element_type=jnp.float32)

    def epilogue(gram):
        sq_i = sqc_ref[...]                       # (tile, 1) f32
        sq_j = sqr_ref[...]                       # (1, tile) f32
        sqdist = jnp.maximum(sq_i + sq_j - 2.0 * gram, 0.0)

        row_idx = bi * tile + lax.broadcasted_iota(jnp.int32, (tile, tile), 0)
        col_idx = bj * tile + lax.broadcasted_iota(jnp.int32, (tile, tile), 1)

        # Exact-zero the self-pair diagonal (can only be hit when bi == bj);
        # dist = sqrt(.) + 1e-8 then matches torch.cdist(...) + 1e-8.
        sqdist = jnp.where(row_idx == col_idx, 0.0, sqdist)
        dist = jnp.sqrt(sqdist) + 1e-8

        match = labc_ref[...] == labr_ref[...]
        if has_pad:
            # Only emitted when the batch was padded up to a tile multiple.
            valid = jnp.logical_and(row_idx < batch, col_idx < batch)
            matchf = jnp.logical_and(match, valid).astype(jnp.float32)
            negf = valid.astype(jnp.float32) - matchf
        else:
            matchf = match.astype(jnp.float32)
            negf = 1.0 - matchf

        hinge = jnp.maximum(margin - dist, 0.0)

        # Triangular grid: off-diagonal blocks also stand in for their mirror
        # image, so weight them by 2 (distance / label matrices are symmetric).
        w = jnp.where(bi == bj, 1.0, 2.0).astype(jnp.float32)
        pos_t = jnp.sum(matchf * (dist * dist), keepdims=True) * w     # (1,1)
        neg_t = jnp.sum(negf * (hinge * hinge), keepdims=True) * w
        npos_t = jnp.sum(matchf, keepdims=True) * w

        # Pack the three partials into lanes 0..2 of this block pair's private
        # (8,128) slab — a single unmasked lane-dense vector store.
        sub = lax.broadcasted_iota(jnp.int32, (8, 128), 0)
        lane = lax.broadcasted_iota(jnp.int32, (8, 128), 1)
        first = sub == 0
        m0 = jnp.logical_and(first, lane == 0).astype(jnp.float32)
        m1 = jnp.logical_and(first, lane == 1).astype(jnp.float32)
        m2 = jnp.logical_and(first, lane == 2).astype(jnp.float32)
        out_ref[0, :, :] = m0 * pos_t + m1 * neg_t + m2 * npos_t

    if single_k:
        # Whole embed dim in one block: no Gram scratch, no zero/accumulate RMW.
        epilogue(part)
    else:
        gram_ref, = scratch

        @pl.when(k == 0)
        def _():
            gram_ref[...] = part          # overwrite; saves zero + load + store

        @pl.when(k > 0)
        def _():
            gram_ref[...] += part

        @pl.when(k == nk - 1)
        def _():
            epilogue(gram_ref[...])


def contrastive_loss_with_batch_balancing(embeddings, labels, margin: float = 0.2,
                                          use_bf16_matmul=None, max_k_chunk=None):
    """embeddings: (B, D) float; labels: (B,) int. Returns scalar f32 loss."""
    B, D = embeddings.shape

    # Pair-tile size: bigger tiles cut HBM traffic (scales ~1/tile); thresholds
    # chosen so padding waste stays bounded for mid-sized batches.
    if B >= 1024:
        tile = 512
    elif B >= 256:
        tile = 256
    else:
        tile = _round_up(max(B, 1), 128)
    Bp = _round_up(B, tile)
    gi = Bp // tile
    has_pad = Bp != B

    # bf16 Gram operands only when the inputs are already bf16 (the Gram-trick
    # cancellation for near-duplicate positive pairs degrades otherwise),
    # unless explicitly requested.
    if use_bf16_matmul is None:
        use_bf16_matmul = embeddings.dtype == jnp.bfloat16
    mm_dtype = jnp.bfloat16 if use_bf16_matmul else embeddings.dtype
    itemsize = jnp.dtype(mm_dtype).itemsize

    # K blocking: prefer a single full-D block when 2 operands x 2 pipeline
    # buffers fit a conservative VMEM budget (safe even on v7x's 64 MiB VMEM);
    # otherwise chunk K and accumulate the Gram block in a VMEM scratch.
    OPERAND_BUDGET = 20 * 1024 * 1024
    tk_cap = max(128, (OPERAND_BUDGET // (4 * tile * itemsize)) // 128 * 128)
    if max_k_chunk is not None:
        tk_cap = min(tk_cap, max(128, (max_k_chunk // 128) * 128))
    Dp128 = _round_up(D, 128)
    if tk_cap >= Dp128:
        single_k, tk, Dp, gk = True, Dp128, Dp128, 1
    else:
        single_k = False
        tk = tk_cap
        Dp = _round_up(D, tk)
        gk = Dp // tk

    emb = embeddings.astype(mm_dtype)
    if (Bp, Dp) != (B, D):
        emb = jnp.pad(emb, ((0, Bp - B), (0, Dp - D)))

    # Squared norms from the same (possibly cast) values the MXU sees, shaped
    # as a column AND a row so the kernel never transposes vectors.
    sq = jnp.sum(emb.astype(jnp.float32) ** 2, axis=-1)
    sq_col = sq.reshape(Bp, 1)
    sq_row = sq.reshape(1, Bp)

    lab = labels.astype(jnp.int32)
    if Bp != B:
        lab = jnp.pad(lab, (0, Bp - B))
    lab_col = lab.reshape(Bp, 1)
    lab_row = lab.reshape(1, Bp)

    # Upper-triangular block pairs (i <= j); i-major ordering so the row
    # embedding block is reused across the whole j sweep (Pallas skips the
    # re-fetch when the block index does not change).
    pairs_i, pairs_j = np.triu_indices(gi)
    i_idx = jnp.asarray(pairs_i, dtype=jnp.int32)
    j_idx = jnp.asarray(pairs_j, dtype=jnp.int32)
    T = int(pairs_i.shape[0])

    kernel = partial(_contrastive_tri_kernel, margin=float(margin), batch=B,
                     tile=tile, single_k=single_k, has_pad=has_pad)
    scratch = [] if single_k else [pltpu.VMEM((tile, tile), jnp.float32)]

    partials = pl.pallas_call(
        kernel,
        out_shape=jax.ShapeDtypeStruct((T, 8, 128), jnp.float32),
        grid_spec=pltpu.PrefetchScalarGridSpec(
            num_scalar_prefetch=2,
            grid=(T, gk),
            in_specs=[
                pl.BlockSpec((tile, tk), lambda t, k, ii, jj: (ii[t], k)),  # row emb
                pl.BlockSpec((tile, tk), lambda t, k, ii, jj: (jj[t], k)),  # col emb
                pl.BlockSpec((tile, 1), lambda t, k, ii, jj: (ii[t], 0)),   # sq col
                pl.BlockSpec((1, tile), lambda t, k, ii, jj: (0, jj[t])),   # sq row
                pl.BlockSpec((tile, 1), lambda t, k, ii, jj: (ii[t], 0)),   # lab col
                pl.BlockSpec((1, tile), lambda t, k, ii, jj: (0, jj[t])),   # lab row
            ],
            out_specs=pl.BlockSpec((1, 8, 128), lambda t, k, ii, jj: (t, 0, 0)),
            scratch_shapes=scratch,
        ),
        compiler_params=pltpu.CompilerParams(
            dimension_semantics=("parallel", "arbitrary"),
            vmem_limit_bytes=40 * 1024 * 1024),
    )(i_idx, j_idx, emb, emb, sq_col, sq_row, lab_col, lab_row)

    pos_sum = jnp.sum(partials[:, 0, 0])
    neg_sum = jnp.sum(partials[:, 0, 1])
    num_pos = jnp.sum(partials[:, 0, 2])
    # Exact in f32 up to B ~ 4096; beyond that the count is approximate but the
    # effect on the normalized loss is negligible.
    num_neg = jnp.float32(B * B) - num_pos

    pos_loss = pos_sum / (num_pos + 1e-8)
    neg_loss = neg_sum / (num_neg + 1e-8)
    return pos_loss + neg_loss


def _reference_loss(embeddings, labels, margin: float = 0.2):
    """Pure-JAX reference mirroring the PyTorch module."""
    x = embeddings.astype(jnp.float32)
    diff = x[:, None, :] - x[None, :, :]
    dist = jnp.sqrt(jnp.maximum(jnp.sum(diff * diff, axis=-1), 0.0)) + 1e-8
    lm = (labels[None, :] == labels[:, None]).astype(jnp.float32)
    pos = lm * dist ** 2
    neg = (1.0 - lm) * jnp.clip(margin - dist, 0.0) ** 2
    return pos.sum() / (lm.sum() + 1e-8) + neg.sum() / ((1.0 - lm).sum() + 1e-8)


if __name__ == "__main__":
    key = jax.random.PRNGKey(0)
    k1, k2, k3, k4, k5, k6 = jax.random.split(key, 6)

    # 1) Small test (shapes implied by the module: (batch, embed_dim) + (batch,)).
    B, D = 8, 32
    embeddings = jax.random.normal(k1, (B, D), dtype=jnp.float32)
    labels = jax.random.randint(k2, (B,), 0, 3, dtype=jnp.int32)
    loss = jax.block_until_ready(
        contrastive_loss_with_batch_balancing(embeddings, labels, margin=0.2))
    ref = _reference_loss(embeddings, labels, margin=0.2)
    assert jnp.allclose(loss, ref, rtol=1e-4, atol=1e-5), (loss, ref)

    # 2) Multi-tile triangular grid, batch padding/masking, active hinge term.
    B2, D2 = 300, 160
    emb2 = jax.random.normal(k3, (B2, D2), dtype=jnp.float32)
    lab2 = jax.random.randint(k4, (B2,), 0, 5, dtype=jnp.int32)
    loss2 = jax.block_until_ready(
        contrastive_loss_with_batch_balancing(emb2, lab2, margin=25.0))
    ref2 = _reference_loss(emb2, lab2, margin=25.0)
    assert jnp.allclose(loss2, ref2, rtol=1e-3, atol=1e-4), (loss2, ref2)

    # 3) Force the chunked-K (Gram scratch) path.
    B3, D3 = 300, 384
    emb3 = jax.random.normal(k5, (B3, D3), dtype=jnp.float32)
    lab3 = jax.random.randint(k6, (B3,), 0, 4, dtype=jnp.int32)
    loss3 = jax.block_until_ready(
        contrastive_loss_with_batch_balancing(emb3, lab3, margin=30.0,
                                              max_k_chunk=128))
    ref3 = _reference_loss(emb3, lab3, margin=30.0)
    assert jnp.allclose(loss3, ref3, rtol=1e-3, atol=1e-4), (loss3, ref3)

    # 4) Exact tile multiple: exercises the no-padding (has_pad=False) branch.
    B4, D4 = 256, 128
    emb4 = jax.random.normal(k1, (B4, D4), dtype=jnp.float32)
    lab4 = jax.random.randint(k2, (B4,), 0, 6, dtype=jnp.int32)
    loss4 = jax.block_until_ready(
        contrastive_loss_with_batch_balancing(emb4, lab4, margin=20.0))
    ref4 = _reference_loss(emb4, lab4, margin=20.0)
    assert jnp.allclose(loss4, ref4, rtol=1e-3, atol=1e-4), (loss4, ref4)

    print("KERNEL_OK")
</pallas_src>

<mosaic_0001>
module attributes {stable_mosaic.version = 11 : i64} {
  func.func @_contrastive_tri_kernel(%arg0: i32, %arg1: i32, %arg2: memref<1xi32, #tpu.memory_space<smem>>, %arg3: memref<1xi32, #tpu.memory_space<smem>>, %arg4: memref<128x128xf32, #tpu.memory_space<vmem>>, %arg5: memref<128x128xf32, #tpu.memory_space<vmem>>, %arg6: memref<128x1xf32, #tpu.memory_space<vmem>>, %arg7: memref<1x128xf32, #tpu.memory_space<vmem>>, %arg8: memref<128x1xi32, #tpu.memory_space<vmem>>, %arg9: memref<1x128xi32, #tpu.memory_space<vmem>>, %arg10: memref<1x8x128xf32, #tpu.memory_space<vmem>>) attributes {dimension_semantics = [#tpu.dimension_semantics<parallel>, #tpu.dimension_semantics<arbitrary>], iteration_bounds = array<i64: 1, 1>, scalar_prefetch = 2 : i64, scratch_operands = 0 : i64, tpu.core_type = #tpu.core_type<tc>, window_params = [{transform_indices = @transform_0, window_bounds = array<i64: 128, 128>}, {transform_indices = @transform_1, window_bounds = array<i64: 128, 128>}, {transform_indices = @transform_2, window_bounds = array<i64: 128, 1>}, {transform_indices = @transform_3, window_bounds = array<i64: 1, 128>}, {transform_indices = @transform_4, window_bounds = array<i64: 128, 1>}, {transform_indices = @transform_5, window_bounds = array<i64: 1, 128>}, {transform_indices = @transform_6, window_bounds = array<i64: 1, 8, 128>}]} {
    %0 = arith.index_cast %arg0 : i32 to index
    %1 = memref.load %arg2[%0] : memref<1xi32, #tpu.memory_space<smem>>
    %2 = arith.index_cast %arg0 : i32 to index
    %3 = memref.load %arg3[%2] : memref<1xi32, #tpu.memory_space<smem>>
    %c0 = arith.constant 0 : index
    %c0_0 = arith.constant 0 : index
    %4 = vector.load %arg4[%c0, %c0_0] : memref<128x128xf32, #tpu.memory_space<vmem>>, vector<128x128xf32>
    %c0_1 = arith.constant 0 : index
    %c0_2 = arith.constant 0 : index
    %5 = vector.load %arg5[%c0_1, %c0_2] : memref<128x128xf32, #tpu.memory_space<vmem>>, vector<128x128xf32>
    %cst = arith.constant dense<0.000000e+00> : vector<128x128xf32>
    %6 = tpu.matmul %4, %5, %cst {dimension_numbers = #tpu.dot_dimension_numbers<[1], [1], [0], [0], [0, 0, 1, 0], [], []>} : vector<128x128xf32>, vector<128x128xf32>, vector<128x128xf32> -> vector<128x128xf32>
    %c0_3 = arith.constant 0 : index
    %c0_4 = arith.constant 0 : index
    %7 = vector.load %arg6[%c0_3, %c0_4] : memref<128x1xf32, #tpu.memory_space<vmem>>, vector<128x1xf32>
    %c0_5 = arith.constant 0 : index
    %c0_6 = arith.constant 0 : index
    %8 = vector.load %arg7[%c0_5, %c0_6] : memref<1x128xf32, #tpu.memory_space<vmem>>, vector<1x128xf32>
    %9 = vector.broadcast %7 : vector<128x1xf32> to vector<128x128xf32>
    %10 = vector.broadcast %8 : vector<1x128xf32> to vector<128x128xf32>
    %11 = arith.addf %9, %10 : vector<128x128xf32>
    %cst_7 = arith.constant 2.000000e+00 : f32
    %12 = vector.broadcast %cst_7 : f32 to vector<128x128xf32>
    %13 = arith.mulf %12, %6 : vector<128x128xf32>
    %14 = arith.subf %11, %13 : vector<128x128xf32>
    %cst_8 = arith.constant 0.000000e+00 : f32
    %15 = vector.broadcast %cst_8 : f32 to vector<128x128xf32>
    %16 = arith.maximumf %14, %15 : vector<128x128xf32>
    %c128_i32 = arith.constant 128 : i32
    %17 = arith.muli %1, %c128_i32 : i32
    %18 = tpu.iota {dimensions = array<i32: 0>} : vector<128x128xi32>
    %19 = vector.broadcast %17 : i32 to vector<128x128xi32>
    %20 = arith.addi %19, %18 : vector<128x128xi32>
    %c128_i32_9 = arith.constant 128 : i32
    %21 = arith.muli %3, %c128_i32_9 : i32
    %22 = tpu.iota {dimensions = array<i32: 1>} : vector<128x128xi32>
    %23 = vector.broadcast %21 : i32 to vector<128x128xi32>
    %24 = arith.addi %23, %22 : vector<128x128xi32>
    %25 = arith.cmpi eq, %20, %24 : vector<128x128xi32>
    %cst_10 = arith.constant 0.000000e+00 : f32
    %26 = vector.broadcast %cst_10 : f32 to vector<128x128xf32>
    %27 = arith.select %25, %26, %16 : vector<128x128xi1>, vector<128x128xf32>
    %28 = math.sqrt %27 : vector<128x128xf32>
    %cst_11 = arith.constant 9.99999993E-9 : f32
    %29 = vector.broadcast %cst_11 : f32 to vector<128x128xf32>
    %30 = arith.addf %28, %29 : vector<128x128xf32>
    %c0_12 = arith.constant 0 : index
    %c0_13 = arith.constant 0 : index
    %31 = vector.load %arg8[%c0_12, %c0_13] : memref<128x1xi32, #tpu.memory_space<vmem>>, vector<128x1xi32>
    %c0_14 = arith.constant 0 : index
    %c0_15 = arith.constant 0 : index
    %32 = vector.load %arg9[%c0_14, %c0_15] : memref<1x128xi32, #tpu.memory_space<vmem>>, vector<1x128xi32>
    %33 = vector.broadcast %31 : vector<128x1xi32> to vector<128x128xi32>
    %34 = vector.broadcast %32 : vector<1x128xi32> to vector<128x128xi32>
    %35 = arith.cmpi eq, %33, %34 : vector<128x128xi32>
    %c8_i32 = arith.constant 8 : i32
    %36 = vector.broadcast %c8_i32 : i32 to vector<128x128xi32>
    %37 = arith.cmpi slt, %20, %36 : vector<128x128xi32>
    %c8_i32_16 = arith.constant 8 : i32
    %38 = vector.broadcast %c8_i32_16 : i32 to vector<128x128xi32>
    %39 = arith.cmpi slt, %24, %38 : vector<128x128xi32>
    %40 = arith.andi %37, %39 : vector<128x128xi1>
    %41 = arith.andi %35, %40 : vector<128x128xi1>
    %42 = arith.extui %41 : vector<128x128xi1> to vector<128x128xi32>
    %43 = arith.sitofp %42 : vector<128x128xi32> to vector<128x128xf32>
    %44 = arith.extui %40 : vector<128x128xi1> to vector<128x128xi32>
    %45 = arith.sitofp %44 : vector<128x128xi32> to vector<128x128xf32>
    %46 = arith.subf %45, %43 : vector<128x128xf32>
    %cst_17 = arith.constant 2.000000e-01 : f32
    %47 = vector.broadcast %cst_17 : f32 to vector<128x128xf32>
    %48 = arith.subf %47, %30 : vector<128x128xf32>
    %cst_18 = arith.constant 0.000000e+00 : f32
    %49 = vector.broadcast %cst_18 : f32 to vector<128x128xf32>
    %50 = arith.maximumf %48, %49 : vector<128x128xf32>
    %51 = arith.cmpi eq, %1, %3 : i32
    %cst_19 = arith.constant 1.000000e+00 : f32
    %cst_20 = arith.constant 2.000000e+00 : f32
    %52 = arith.select %51, %cst_19, %cst_20 : f32
    %53 = arith.mulf %30, %30 : vector<128x128xf32>
    %54 = arith.mulf %43, %53 : vector<128x128xf32>
    %55 = vector.shape_cast %54 : vector<128x128xf32> to vector<1x128x128xf32>
    %cst_21 = arith.constant dense<0.000000e+00> : vector<1xf32>
    %56 = vector.multi_reduction <add>, %55, %cst_21 [1, 2] : vector<1x128x128xf32> to vector<1xf32>
    %57 = vector.shape_cast %56 : vector<1xf32> to vector<1x1x1xf32>
    %58 = vector.extract %57[0, 0, 0] : f32 from vector<1x1x1xf32>
    %59 = vector.broadcast %58 : f32 to vector<1x1xf32>
    %60 = vector.broadcast %52 : f32 to vector<1x1xf32>
    %61 = arith.mulf %59, %60 : vector<1x1xf32>
    %62 = arith.mulf %50, %50 : vector<128x128xf32>
    %63 = arith.mulf %46, %62 : vector<128x128xf32>
    %64 = vector.shape_cast %63 : vector<128x128xf32> to vector<1x128x128xf32>
    %cst_22 = arith.constant dense<0.000000e+00> : vector<1xf32>
    %65 = vector.multi_reduction <add>, %64, %cst_22 [1, 2] : vector<1x128x128xf32> to vector<1xf32>
    %66 = vector.shape_cast %65 : vector<1xf32> to vector<1x1x1xf32>
    %67 = vector.extract %66[0, 0, 0] : f32 from vector<1x1x1xf32>
    %68 = vector.broadcast %67 : f32 to vector<1x1xf32>
    %69 = vector.broadcast %52 : f32 to vector<1x1xf32>
    %70 = arith.mulf %68, %69 : vector<1x1xf32>
    %71 = vector.shape_cast %43 : vector<128x128xf32> to vector<1x128x128xf32>
    %cst_23 = arith.constant dense<0.000000e+00> : vector<1xf32>
    %72 = vector.multi_reduction <add>, %71, %cst_23 [1, 2] : vector<1x128x128xf32> to vector<1xf32>
    %73 = vector.shape_cast %72 : vector<1xf32> to vector<1x1x1xf32>
    %74 = vector.extract %73[0, 0, 0] : f32 from vector<1x1x1xf32>
    %75 = vector.broadcast %74 : f32 to vector<1x1xf32>
    %76 = vector.broadcast %52 : f32 to vector<1x1xf32>
    %77 = arith.mulf %75, %76 : vector<1x1xf32>
    %78 = tpu.iota {dimensions = array<i32: 0>} : vector<8x128xi32>
    %79 = tpu.iota {dimensions = array<i32: 1>} : vector<8x128xi32>
    %c0_i32 = arith.constant 0 : i32
    %80 = vector.broadcast %c0_i32 : i32 to vector<8x128xi32>
    %81 = arith.cmpi eq, %78, %80 : vector<8x128xi32>
    %c0_i32_24 = arith.constant 0 : i32
    %82 = vector.broadcast %c0_i32_24 : i32 to vector<8x128xi32>
    %83 = arith.cmpi eq, %79, %82 : vector<8x128xi32>
    %84 = arith.andi %81, %83 : vector<8x128xi1>
    %85 = arith.extui %84 : vector<8x128xi1> to vector<8x128xi32>
    %86 = arith.sitofp %85 : vector<8x128xi32> to vector<8x128xf32>
    %c1_i32 = arith.constant 1 : i32
    %87 = vector.broadcast %c1_i32 : i32 to vector<8x128xi32>
    %88 = arith.cmpi eq, %79, %87 : vector<8x128xi32>
    %89 = arith.andi %81, %88 : vector<8x128xi1>
    %90 = arith.extui %89 : vector<8x128xi1> to vector<8x128xi32>
    %91 = arith.sitofp %90 : vector<8x128xi32> to vector<8x128xf32>
    %c2_i32 = arith.constant 2 : i32
    %92 = vector.broadcast %c2_i32 : i32 to vector<8x128xi32>
    %93 = arith.cmpi eq, %79, %92 : vector<8x128xi32>
    %94 = arith.andi %81, %93 : vector<8x128xi1>
    %95 = arith.extui %94 : vector<8x128xi1> to vector<8x128xi32>
    %96 = arith.sitofp %95 : vector<8x128xi32> to vector<8x128xf32>
    %97 = vector.broadcast %61 : vector<1x1xf32> to vector<8x128xf32>
    %98 = arith.mulf %86, %97 : vector<8x128xf32>
    %99 = vector.broadcast %70 : vector<1x1xf32> to vector<8x128xf32>
    %100 = arith.mulf %91, %99 : vector<8x128xf32>
    %101 = arith.addf %98, %100 : vector<8x128xf32>
    %102 = vector.broadcast %77 : vector<1x1xf32> to vector<8x128xf32>
    %103 = arith.mulf %96, %102 : vector<8x128xf32>
    %104 = arith.addf %101, %103 : vector<8x128xf32>
    %c0_25 = arith.constant 0 : index
    %c0_26 = arith.constant 0 : index
    %c0_27 = arith.constant 0 : index
    %105 = vector.load %arg10[%c0_25, %c0_26, %c0_27] : memref<1x8x128xf32, #tpu.memory_space<vmem>>, vector<1x8x128xf32>
    %106 = vector.shape_cast %105 : vector<1x8x128xf32> to vector<8x128xf32>
    %107 = vector.shape_cast %104 : vector<8x128xf32> to vector<1x8x128xf32>
    tpu.vector_store %arg10[%c0_25, %c0_26, %c0_27], %107 {strides = array<i32>} : memref<1x8x128xf32, #tpu.memory_space<vmem>>, vector<1x8x128xf32>,
    return
  }
  func.func @transform_0(%arg0: i32, %arg1: i32, %arg2: memref<1xi32, #tpu.memory_space<smem>>, %arg3: memref<1xi32, #tpu.memory_space<smem>>) -> (i32, i32) {
    %0 = arith.index_cast %arg0 : i32 to index
    %1 = memref.load %arg2[%0] : memref<1xi32, #tpu.memory_space<smem>>
    %c0_i32 = arith.constant 0 : i32
    return %1, %arg1 : i32, i32
  }
  func.func @transform_1(%arg0: i32, %arg1: i32, %arg2: memref<1xi32, #tpu.memory_space<smem>>, %arg3: memref<1xi32, #tpu.memory_space<smem>>) -> (i32, i32) {
    %0 = arith.index_cast %arg0 : i32 to index
    %1 = memref.load %arg3[%0] : memref<1xi32, #tpu.memory_space<smem>>
    %c0_i32 = arith.constant 0 : i32
    return %1, %arg1 : i32, i32
  }
  func.func @transform_2(%arg0: i32, %arg1: i32, %arg2: memref<1xi32, #tpu.memory_space<smem>>, %arg3: memref<1xi32, #tpu.memory_space<smem>>) -> (i32, i32) {
    %0 = arith.index_cast %arg0 : i32 to index
    %1 = memref.load %arg2[%0] : memref<1xi32, #tpu.memory_space<smem>>
    %c0_i32 = arith.constant 0 : i32
    %c0_i32_0 = arith.constant 0 : i32
    return %1, %c0_i32 : i32, i32
  }
  func.func @transform_3(%arg0: i32, %arg1: i32, %arg2: memref<1xi32, #tpu.memory_space<smem>>, %arg3: memref<1xi32, #tpu.memory_space<smem>>) -> (i32, i32) {
    %0 = arith.index_cast %arg0 : i32 to index
    %1 = memref.load %arg3[%0] : memref<1xi32, #tpu.memory_space<smem>>
    %c0_i32 = arith.constant 0 : i32
    %c0_i32_0 = arith.constant 0 : i32
    return %c0_i32, %1 : i32, i32
  }
  func.func @transform_4(%arg0: i32, %arg1: i32, %arg2: memref<1xi32, #tpu.memory_space<smem>>, %arg3: memref<1xi32, #tpu.memory_space<smem>>) -> (i32, i32) {
    %0 = arith.index_cast %arg0 : i32 to index
    %1 = memref.load %arg2[%0] : memref<1xi32, #tpu.memory_space<smem>>
    %c0_i32 = arith.constant 0 : i32
    %c0_i32_0 = arith.constant 0 : i32
    return %1, %c0_i32 : i32, i32
  }
  func.func @transform_5(%arg0: i32, %arg1: i32, %arg2: memref<1xi32, #tpu.memory_space<smem>>, %arg3: memref<1xi32, #tpu.memory_space<smem>>) -> (i32, i32) {
    %0 = arith.index_cast %arg0 : i32 to index
    %1 = memref.load %arg3[%0] : memref<1xi32, #tpu.memory_space<smem>>
    %c0_i32 = arith.constant 0 : i32
    %c0_i32_0 = arith.constant 0 : i32
    return %c0_i32, %1 : i32, i32
  }
  func.func @transform_6(%arg0: i32, %arg1: i32, %arg2: memref<1xi32, #tpu.memory_space<smem>>, %arg3: memref<1xi32, #tpu.memory_space<smem>>) -> (i32, i32, i32) {
    %c0_i32 = arith.constant 0 : i32
    %c0_i32_0 = arith.constant 0 : i32
    %c0_i32_1 = arith.constant 0 : i32
    return %arg0, %c0_i32, %c0_i32_0 : i32, i32, i32
  }
}

</mosaic_0001>

<llo_original>
// kernel: tpu_custom_call.1
$region0: #{tpu_custom_call.1}
  #allocation0 [shape = 'u32[]', space=smem, size = 0x4, offset = 0x4, fixed_abs, tag = 'smem constant byte address 0x4 - core index']
  #allocation1 [shape = 'u32[144,128]{1,0:T(1,128)}', space=vmem, size = 0x12000, scoped, tag = 'internal scratch']
  #allocation2 [shape = 's32[1]{0}', space=sflag, size = 0x4, scoped, tag = 'scoped memory for tpu_custom_call.1']
  #allocation3 [shape = 's32[1]{0:T(128)S(6)}', space=smem, size = 0x200, scoped, tag = 'prefetched SMEM operand 0']
  #allocation4 [shape = 's32[1]{0:T(128)S(6)}', space=smem, size = 0x200, scoped, tag = 'prefetched SMEM operand 1']
  %s0 = inlined_call_operand.<no memory space> [shape: s32[1], index: 0, kind: input, shape index: {}]
  %s1 = inlined_call_operand.<no memory space> [shape: s32[1], index: 1, kind: input, shape index: {}]
  %s2 = inlined_call_operand.vmem [shape: f32[128,128], index: 2, kind: input, shape index: {}]
  %s3 = inlined_call_operand.vmem [shape: f32[128,128], index: 3, kind: input, shape index: {}]
  %s4 = inlined_call_operand.vmem [shape: f32[128,1], index: 4, kind: input, shape index: {}]
  %s5 = inlined_call_operand.vmem [shape: f32[1,128], index: 5, kind: input, shape index: {}]
  %s6 = inlined_call_operand.vmem [shape: s32[128,1], index: 6, kind: input, shape index: {}]
  %s7 = inlined_call_operand.vmem [shape: s32[1,128], index: 7, kind: input, shape index: {}]
  %s8 = inlined_call_operand.hbm [shape: f32[1,8,128], index: 8, kind: output, shape index: {}]
  %s9 = sld [smem:[#allocation0]]
  $region34: #{tpu_custom_call.1} parent=0
    _
  %s11 = ssub.s32 1, %s9
  %s12 = scalar_select 0, %s11, %s9
  %13 = sst [smem:[#allocation3]] %s0
  %14 = sst [smem:[#allocation4]] %s1
  $region1: #{tpu_custom_call.1} parent=0
    #allocation5 [shape = 'u8[4096]{0}', space=vmem, size = 0x1000, scoped, tag = 'output window, operand 0, single buffered']
    #allocation6 [shape = 's32[1]{0}', space=sflag, size = 0x4, scoped, tag = 'scoped memory for tpu_custom_call.1']
    %15 = vsyncpa [#allocation6], 0
    // Predicated region
    $region2: #{tpu_custom_call.1} parent=1 // pred_check
      _
    $region3: #{tpu_custom_call.1} parent=1 // pred_check_branch
      %17 = sbr.rel (0) target = $region5
    $region4: #{tpu_custom_call.1} parent=1 // pred_region
      %s18 = sld [smem:[#allocation3]]
      %s19 = smul.u32 16, %s18
      %p20 = scmp.lt.s32.totalorder %s19, 15
      %s21 = scalar_select %p20, %s19, 15
      %s22 = smul.addr %s21, 8
      %s23 = scalar_lea.vmem %s2, %s22
      %s24 = sld [smem:[#allocation3]]
      %s25 = smul.u32 16, %s24
    $region5: #{tpu_custom_call.1} parent=1 // pred_fallthru
      _
    // Predicated region
    $region6: #{tpu_custom_call.1} parent=1 // pred_check
      _
    $region7: #{tpu_custom_call.1} parent=1 // pred_check_branch
      %27 = sbr.rel (0) target = $region9
    $region8: #{tpu_custom_call.1} parent=1 // pred_region
      %s28 = sld [smem:[#allocation4]]
      %s29 = smul.u32 16, %s28
      %p30 = scmp.lt.s32.totalorder %s29, 15
      %s31 = scalar_select %p30, %s29, 15
      %s32 = smul.addr %s31, 8
      %s33 = scalar_lea.vmem %s3, %s32
      %s34 = sld [smem:[#allocation4]]
      %s35 = smul.u32 16, %s34
    $region9: #{tpu_custom_call.1} parent=1 // pred_fallthru
      _
    // Predicated region
    $region10: #{tpu_custom_call.1} parent=1 // pred_check
      _
    $region11: #{tpu_custom_call.1} parent=1 // pred_check_branch
      %37 = sbr.rel (0) target = $region13
    $region12: #{tpu_custom_call.1} parent=1 // pred_region
      %s38 = sld [smem:[#allocation3]]
      %s39 = smul.u32 16, %s38
      %p40 = scmp.lt.s32.totalorder %s39, 15
      %s41 = scalar_select %p40, %s39, 15
      %s42 = smul.addr %s41, 8
      %s43 = scalar_lea.vmem %s4, %s42
      %s44 = sld [smem:[#allocation3]]
      %s45 = smul.u32 16, %s44
    $region13: #{tpu_custom_call.1} parent=1 // pred_fallthru
      _
    // Predicated region
    $region14: #{tpu_custom_call.1} parent=1 // pred_check
      _
    $region15: #{tpu_custom_call.1} parent=1 // pred_check_branch
      %47 = sbr.rel (0) target = $region17
    $region16: #{tpu_custom_call.1} parent=1 // pred_region
      %s48 = sld [smem:[#allocation4]]
      %p49 = scmp.lt.s32.totalorder %s48, 0
      %s50 = scalar_select %p49, %s48, 0
      %s51 = scalar_lea.vmem %s5, %s50
      %s52 = sld [smem:[#allocation4]]
    $region17: #{tpu_custom_call.1} parent=1 // pred_fallthru
      _
    // Predicated region
    $region18: #{tpu_custom_call.1} parent=1 // pred_check
      _
    $region19: #{tpu_custom_call.1} parent=1 // pred_check_branch
      %54 = sbr.rel (0) target = $region21
    $region20: #{tpu_custom_call.1} parent=1 // pred_region
      %s55 = sld [smem:[#allocation3]]
      %s56 = smul.u32 16, %s55
      %p57 = scmp.lt.s32.totalorder %s56, 15
      %s58 = scalar_select %p57, %s56, 15
      %s59 = smul.addr %s58, 8
      %s60 = scalar_lea.vmem %s6, %s59
      %s61 = sld [smem:[#allocation3]]
      %s62 = smul.u32 16, %s61
    $region21: #{tpu_custom_call.1} parent=1 // pred_fallthru
      _
    // Predicated region
    $region22: #{tpu_custom_call.1} parent=1 // pred_check
      _
    $region23: #{tpu_custom_call.1} parent=1 // pred_check_branch
      %64 = sbr.rel (0) target = $region25
    $region24: #{tpu_custom_call.1} parent=1 // pred_region
      %s65 = sld [smem:[#allocation4]]
      %p66 = scmp.lt.s32.totalorder %s65, 0
      %s67 = scalar_select %p66, %s65, 0
      %s68 = scalar_lea.vmem %s7, %s67
      %s69 = sld [smem:[#allocation4]]
    $region25: #{tpu_custom_call.1} parent=1 // pred_fallthru
      _
    %s70 = sld [smem:[#allocation3]]
    %s71 = smul.u32 16, %s70
    %p72 = scmp.lt.s32.totalorder %s71, 15
    %s73 = scalar_select %p72, %s71, 15
    %s74 = smul.addr %s73, 8
    %s75 = scalar_lea.vmem %s2, %s74
    %s76 = sld [smem:[#allocation4]]
    %s77 = smul.u32 16, %s76
    %p78 = scmp.lt.s32.totalorder %s77, 15
    %s79 = scalar_select %p78, %s77, 15
    %s80 = smul.addr %s79, 8
    %s81 = scalar_lea.vmem %s3, %s80
    %s82 = sld [smem:[#allocation3]]
    %s83 = smul.u32 16, %s82
    %p84 = scmp.lt.s32.totalorder %s83, 15
    %s85 = scalar_select %p84, %s83, 15
    %s86 = smul.addr %s85, 8
    %s87 = scalar_lea.vmem %s4, %s86
    %s88 = sld [smem:[#allocation4]]
    %p89 = scmp.lt.s32.totalorder %s88, 0
    %s90 = scalar_select %p89, %s88, 0
    %s91 = scalar_lea.vmem %s5, %s90
    %s92 = sld [smem:[#allocation3]]
    %s93 = smul.u32 16, %s92
    %p94 = scmp.lt.s32.totalorder %s93, 15
    %s95 = scalar_select %p94, %s93, 15
    %s96 = smul.addr %s95, 8
    %s97 = scalar_lea.vmem %s6, %s96
    %s98 = sld [smem:[#allocation4]]
    %p99 = scmp.lt.s32.totalorder %s98, 0
    %s100 = scalar_select %p99, %s98, 0
    %s101 = scalar_lea.vmem %s7, %s100
    %s102 = sld [smem:[#allocation3]]
    %s103 = smul.u32 16, %s102
    %p104 = scmp.lt.s32.totalorder %s103, 15
    %s105 = scalar_select %p104, %s103, 15
    %s106 = smul.addr %s105, 8
    %s107 = scalar_lea.vmem %s2, %s106
    %s108 = sld [smem:[#allocation3]]
    %s109 = smul.u32 16, %s108
    %s110 = sld [smem:[#allocation4]]
    %s111 = smul.u32 16, %s110
    %p112 = scmp.lt.s32.totalorder %s111, 15
    %s113 = scalar_select %p112, %s111, 15
    %s114 = smul.addr %s113, 8
    %s115 = scalar_lea.vmem %s3, %s114
    %s116 = sld [smem:[#allocation4]]
    %s117 = smul.u32 16, %s116
    %s118 = sld [smem:[#allocation3]]
    %s119 = smul.u32 16, %s118
    %p120 = scmp.lt.s32.totalorder %s119, 15
    %s121 = scalar_select %p120, %s119, 15
    %s122 = smul.addr %s121, 8
    %s123 = scalar_lea.vmem %s4, %s122
    %s124 = sld [smem:[#allocation3]]
    %s125 = smul.u32 16, %s124
    %s126 = sld [smem:[#allocation4]]
    %p127 = scmp.lt.s32.totalorder %s126, 0
    %s128 = scalar_select %p127, %s126, 0
    %s129 = scalar_lea.vmem %s5, %s128
    %s130 = sld [smem:[#allocation4]]
    %s131 = sld [smem:[#allocation3]]
    %s132 = smul.u32 16, %s131
    %p133 = scmp.lt.s32.totalorder %s132, 15
    %s134 = scalar_select %p133, %s132, 15
    %s135 = smul.addr %s134, 8
    %s136 = scalar_lea.vmem %s6, %s135
    %s137 = sld [smem:[#allocation3]]
    %s138 = smul.u32 16, %s137
    %s139 = sld [smem:[#allocation4]]
    %p140 = scmp.lt.s32.totalorder %s139, 0
    %s141 = scalar_select %p140, %s139, 0
    %s142 = scalar_lea.vmem %s7, %s141
    %s143 = sld [smem:[#allocation4]]
    %s144 = sld [smem:[#allocation3]]
    %s145 = sld [smem:[#allocation4]]
    %v146 = vld [vmem:[%s107] sm:$0xff]
    %v147 = vld [vmem:[%s107 + $0x8] sm:$0xff]
    %v148 = vld [vmem:[%s107 + $0x10] sm:$0xff]
    %v149 = vld [vmem:[%s107 + $0x18] sm:$0xff]
    %v150 = vld [vmem:[%s107 + $0x20] sm:$0xff]
    %v151 = vld [vmem:[%s107 + $0x28] sm:$0xff]
    %v152 = vld [vmem:[%s107 + $0x30] sm:$0xff]
    %v153 = vld [vmem:[%s107 + $0x38] sm:$0xff]
    %v154 = vld [vmem:[%s107 + $0x40] sm:$0xff]
    %v155 = vld [vmem:[%s107 + $0x48] sm:$0xff]
    %v156 = vld [vmem:[%s107 + $0x50] sm:$0xff]
    %v157 = vld [vmem:[%s107 + $0x58] sm:$0xff]
    %v158 = vld [vmem:[%s107 + $0x60] sm:$0xff]
    %v159 = vld [vmem:[%s107 + $0x68] sm:$0xff]
    %v160 = vld [vmem:[%s107 + $0x70] sm:$0xff]
    %v161 = vld [vmem:[%s107 + $0x78] sm:$0xff]
    %v162 = vld [vmem:[%s115] sm:$0xff]
    %v163 = vld [vmem:[%s115 + $0x8] sm:$0xff]
    %v164 = vld [vmem:[%s115 + $0x10] sm:$0xff]
    %v165 = vld [vmem:[%s115 + $0x18] sm:$0xff]
    %v166 = vld [vmem:[%s115 + $0x20] sm:$0xff]
    %v167 = vld [vmem:[%s115 + $0x28] sm:$0xff]
    %v168 = vld [vmem:[%s115 + $0x30] sm:$0xff]
    %v169 = vld [vmem:[%s115 + $0x38] sm:$0xff]
    %v170 = vld [vmem:[%s115 + $0x40] sm:$0xff]
    %v171 = vld [vmem:[%s115 + $0x48] sm:$0xff]
    %v172 = vld [vmem:[%s115 + $0x50] sm:$0xff]
    %v173 = vld [vmem:[%s115 + $0x58] sm:$0xff]
    %v174 = vld [vmem:[%s115 + $0x60] sm:$0xff]
    %v175 = vld [vmem:[%s115 + $0x68] sm:$0xff]
    %v176 = vld [vmem:[%s115 + $0x70] sm:$0xff]
    %v177 = vld [vmem:[%s115 + $0x78] sm:$0xff]
    %178 = vmatprep.subr.mxu0 0.0
    %179 = vmatpush1.xpose.msra.mxu0 %v162
    %180 = vmatprep.subr.mxu0 0.0
    %181 = vmatpush1.xpose.msra.mxu0 %v163
    %182 = vmatprep.subr.mxu0 0.0
    %183 = vmatpush1.xpose.msra.mxu0 %v164
    %184 = vmatprep.subr.mxu0 0.0
    %185 = vmatpush1.xpose.msra.mxu0 %v165
    %186 = vmatprep.subr.mxu0 0.0
    %187 = vmatpush1.xpose.msra.mxu0 %v166
    %188 = vmatprep.subr.mxu0 0.0
    %189 = vmatpush1.xpose.msra.mxu0 %v167
    %190 = vmatprep.subr.mxu0 0.0
    %191 = vmatpush1.xpose.msra.mxu0 %v168
    %192 = vmatprep.subr.mxu0 0.0
    %193 = vmatpush1.xpose.msra.mxu0 %v169
    %194 = vmatprep.subr.mxu0 0.0
    %195 = vmatpush1.xpose.msra.mxu0 %v170
    %196 = vmatprep.subr.mxu0 0.0
    %197 = vmatpush1.xpose.msra.mxu0 %v171
    %198 = vmatprep.subr.mxu0 0.0
    %199 = vmatpush1.xpose.msra.mxu0 %v172
    %200 = vmatprep.subr.mxu0 0.0
    %201 = vmatpush1.xpose.msra.mxu0 %v173
    %202 = vmatprep.subr.mxu0 0.0
    %203 = vmatpush1.xpose.msra.mxu0 %v174
    %204 = vmatprep.subr.mxu0 0.0
    %205 = vmatpush1.xpose.msra.mxu0 %v175
    %206 = vmatprep.subr.mxu0 0.0
    %207 = vmatpush1.xpose.msra.mxu0 %v176
    %208 = vmatprep.subr.mxu0 0.0
    %209 = vmatpush1.xpose.msra.mxu0 %v177
    %210 = vmatprep.subr.mxu0 0.0
    %211 = vmatpush1.xpose.msra.mxu0 0.0
    %212 = vmatprep.subr.mxu0 0.0
    %213 = vmatpush1.xpose.msra.mxu0 0.0
    %214 = vmatprep.subr.mxu0 0.0
    %215 = vmatpush1.xpose.msra.mxu0 0.0
    %216 = vmatprep.subr.mxu0 0.0
    %217 = vmatpush1.xpose.msra.mxu0 0.0
    %218 = vmatprep.subr.mxu0 0.0
    %219 = vmatpush1.xpose.msra.mxu0 0.0
    %220 = vmatprep.subr.mxu0 0.0
    %221 = vmatpush1.xpose.msra.mxu0 0.0
    %222 = vmatprep.subr.mxu0 0.0
    %223 = vmatpush1.xpose.msra.mxu0 0.0
    %224 = vmatprep.subr.mxu0 0.0
    %225 = vmatpush1.xpose.msra.mxu0 0.0
    %226 = vmatprep.subr.mxu0 0.0
    %227 = vmatpush1.xpose.msra.mxu0 0.0
    %228 = vmatprep.subr.mxu0 0.0
    %229 = vmatpush1.xpose.msra.mxu0 0.0
    %230 = vmatprep.subr.mxu0 0.0
    %231 = vmatpush1.xpose.msra.mxu0 0.0
    %232 = vmatprep.subr.mxu0 0.0
    %233 = vmatpush1.xpose.msra.mxu0 0.0
    %234 = vmatprep.subr.mxu0 0.0
    %235 = vmatpush1.xpose.msra.mxu0 0.0
    %236 = vmatprep.subr.mxu0 0.0
    %237 = vmatpush1.xpose.msra.mxu0 0.0
    %238 = vmatprep.subr.mxu0 0.0
    %239 = vmatpush1.xpose.msra.mxu0 0.0
    %240 = vmatprep.subr.mxu0 0.0
    %241 = vmatpush1.xpose.msra.mxu0 0.0
    %242 = vmatprep.mubr.f32.mxu0 0.0
    %243 = vmatmul.mubr.f32.gmra.mrb[0].mxu0 %v146
    %v244 = vpop.f32.mrb[0].mxu0
    %v245 = vadd.f32 0.0, %v244
    %v246 = vpop.f32.mrb[0].mxu0
    %247 = vmatprep.mubr.f32.mxu0 0.0
    %248 = vmatmul.mubr.f32.gmra.mrb[0].mxu0 %v147
    %v249 = vpop.f32.mrb[0].mxu0
    %v250 = vadd.f32 0.0, %v249
    %v251 = vpop.f32.mrb[0].mxu0
    %252 = vmatprep.mubr.f32.mxu0 0.0
    %253 = vmatmul.mubr.f32.gmra.mrb[0].mxu0 %v148
    %v254 = vpop.f32.mrb[0].mxu0
    %v255 = vadd.f32 0.0, %v254
    %v256 = vpop.f32.mrb[0].mxu0
    %257 = vmatprep.mubr.f32.mxu0 0.0
    %258 = vmatmul.mubr.f32.gmra.mrb[0].mxu0 %v149
    %v259 = vpop.f32.mrb[0].mxu0
    %v260 = vadd.f32 0.0, %v259
    %v261 = vpop.f32.mrb[0].mxu0
    %262 = vmatprep.mubr.f32.mxu0 0.0
    %263 = vmatmul.mubr.f32.gmra.mrb[0].mxu0 %v150
    %v264 = vpop.f32.mrb[0].mxu0
    %v265 = vadd.f32 0.0, %v264
    %v266 = vpop.f32.mrb[0].mxu0
    %267 = vmatprep.mubr.f32.mxu0 0.0
    %268 = vmatmul.mubr.f32.gmra.mrb[0].mxu0 %v151
    %v269 = vpop.f32.mrb[0].mxu0
    %v270 = vadd.f32 0.0, %v269
    %v271 = vpop.f32.mrb[0].mxu0
    %272 = vmatprep.mubr.f32.mxu0 0.0
    %273 = vmatmul.mubr.f32.gmra.mrb[0].mxu0 %v152
    %v274 = vpop.f32.mrb[0].mxu0
    %v275 = vadd.f32 0.0, %v274
    %v276 = vpop.f32.mrb[0].mxu0
    %277 = vmatprep.mubr.f32.mxu0 0.0
    %278 = vmatmul.mubr.f32.gmra.mrb[0].mxu0 %v153
    %v279 = vpop.f32.mrb[0].mxu0
    %v280 = vadd.f32 0.0, %v279
    %v281 = vpop.f32.mrb[0].mxu0
    %282 = vmatprep.mubr.f32.mxu0 0.0
    %283 = vmatmul.mubr.f32.gmra.mrb[0].mxu0 %v154
    %v284 = vpop.f32.mrb[0].mxu0
    %v285 = vadd.f32 0.0, %v284
    %v286 = vpop.f32.mrb[0].mxu0
    %287 = vmatprep.mubr.f32.mxu0 0.0
    %288 = vmatmul.mubr.f32.gmra.mrb[0].mxu0 %v155
    %v289 = vpop.f32.mrb[0].mxu0
    %v290 = vadd.f32 0.0, %v289
    %v291 = vpop.f32.mrb[0].mxu0
    %292 = vmatprep.mubr.f32.mxu0 0.0
    %293 = vmatmul.mubr.f32.gmra.mrb[0].mxu0 %v156
    %v294 = vpop.f32.mrb[0].mxu0
    %v295 = vadd.f32 0.0, %v294
    %v296 = vpop.f32.mrb[0].mxu0
    %297 = vmatprep.mubr.f32.mxu0 0.0
    %298 = vmatmul.mubr.f32.gmra.mrb[0].mxu0 %v157
    %v299 = vpop.f32.mrb[0].mxu0
    %v300 = vadd.f32 0.0, %v299
    %v301 = vpop.f32.mrb[0].mxu0
    %302 = vmatprep.mubr.f32.mxu0 0.0
    %303 = vmatmul.mubr.f32.gmra.mrb[0].mxu0 %v158
    %v304 = vpop.f32.mrb[0].mxu0
    %v305 = vadd.f32 0.0, %v304
    %v306 = vpop.f32.mrb[0].mxu0
    %307 = vmatprep.mubr.f32.mxu0 0.0
    %308 = vmatmul.mubr.f32.gmra.mrb[0].mxu0 %v159
    %v309 = vpop.f32.mrb[0].mxu0
    %v310 = vadd.f32 0.0, %v309
    %v311 = vpop.f32.mrb[0].mxu0
    %312 = vmatprep.mubr.f32.mxu0 0.0
    %313 = vmatmul.mubr.f32.gmra.mrb[0].mxu0 %v160
    %v314 = vpop.f32.mrb[0].mxu0
    %v315 = vadd.f32 0.0, %v314
    %v316 = vpop.f32.mrb[0].mxu0
    %317 = vmatprep.mubr.f32.mxu0 0.0
    %318 = vmatmul.mubr.f32.gmra.mrb[0].mxu0 %v161
    %v319 = vpop.f32.mrb[0].mxu0
    %v320 = vadd.f32 0.0, %v319
    %v321 = vpop.f32.mrb[0].mxu0
    %322 = vdwg.mxu0
    %v323 = vld [vmem:[%s123] sm:$0xff]
    %v324 = vld [vmem:[%s123 + $0x8] sm:$0xff]
    %v325 = vld [vmem:[%s123 + $0x10] sm:$0xff]
    %v326 = vld [vmem:[%s123 + $0x18] sm:$0xff]
    %v327 = vld [vmem:[%s123 + $0x20] sm:$0xff]
    %v328 = vld [vmem:[%s123 + $0x28] sm:$0xff]
    %v329 = vld [vmem:[%s123 + $0x30] sm:$0xff]
    %v330 = vld [vmem:[%s123 + $0x38] sm:$0xff]
    %v331 = vld [vmem:[%s123 + $0x40] sm:$0xff]
    %v332 = vld [vmem:[%s123 + $0x48] sm:$0xff]
    %v333 = vld [vmem:[%s123 + $0x50] sm:$0xff]
    %v334 = vld [vmem:[%s123 + $0x58] sm:$0xff]
    %v335 = vld [vmem:[%s123 + $0x60] sm:$0xff]
    %v336 = vld [vmem:[%s123 + $0x68] sm:$0xff]
    %v337 = vld [vmem:[%s123 + $0x70] sm:$0xff]
    %v338 = vld [vmem:[%s123 + $0x78] sm:$0xff]
    %v339 = vld [vmem:[%s129] sm:$0x1]
    %341 = vset.pattern.permute.xlu0 0
    %342 = vperm.xlu0 %341, %v323
    %v343 = vpop.permute.xlu0 %342
    %346 = vset.pattern.permute.xlu0 0
    %347 = vperm.xlu0 %346, %v324
    %v348 = vpop.permute.xlu0 %347
    %351 = vset.pattern.permute.xlu0 0
    %352 = vperm.xlu0 %351, %v325
    %v353 = vpop.permute.xlu0 %352
    %356 = vset.pattern.permute.xlu0 0
    %357 = vperm.xlu0 %356, %v326
    %v358 = vpop.permute.xlu0 %357
    %361 = vset.pattern.permute.xlu0 0
    %362 = vperm.xlu0 %361, %v327
    %v363 = vpop.permute.xlu0 %362
    %366 = vset.pattern.permute.xlu0 0
    %367 = vperm.xlu0 %366, %v328
    %v368 = vpop.permute.xlu0 %367
    %371 = vset.pattern.permute.xlu0 0
    %372 = vperm.xlu0 %371, %v329
    %v373 = vpop.permute.xlu0 %372
    %376 = vset.pattern.permute.xlu0 0
    %377 = vperm.xlu0 %376, %v330
    %v378 = vpop.permute.xlu0 %377
    %381 = vset.pattern.permute.xlu0 0
    %382 = vperm.xlu0 %381, %v331
    %v383 = vpop.permute.xlu0 %382
    %386 = vset.pattern.permute.xlu0 0
    %387 = vperm.xlu0 %386, %v332
    %v388 = vpop.permute.xlu0 %387
    %391 = vset.pattern.permute.xlu0 0
    %392 = vperm.xlu0 %391, %v333
    %v393 = vpop.permute.xlu0 %392
    %396 = vset.pattern.permute.xlu0 0
    %397 = vperm.xlu0 %396, %v334
    %v398 = vpop.permute.xlu0 %397
    %401 = vset.pattern.permute.xlu0 0
    %402 = vperm.xlu0 %401, %v335
    %v403 = vpop.permute.xlu0 %402
    %406 = vset.pattern.permute.xlu0 0
    %407 = vperm.xlu0 %406, %v336
    %v408 = vpop.permute.xlu0 %407
    %411 = vset.pattern.permute.xlu0 0
    %412 = vperm.xlu0 %411, %v337
    %v413 = vpop.permute.xlu0 %412
    %416 = vset.pattern.permute.xlu0 0
    %417 = vperm.xlu0 %416, %v338
    %v418 = vpop.permute.xlu0 %417
    %v421 = vlaneseq
    %v422 = vshrl.u32 %v421, 7
    %v423 = vsub.s32 0, %v422
    %v424 = vrot.slane %v339, %v423
    %v426 = vadd.f32 %v343, %v424
    %v427 = vadd.f32 %v348, %v424
    %v428 = vadd.f32 %v353, %v424
    %v429 = vadd.f32 %v358, %v424
    %v430 = vadd.f32 %v363, %v424
    %v431 = vadd.f32 %v368, %v424
    %v432 = vadd.f32 %v373, %v424
    %v433 = vadd.f32 %v378, %v424
    %v434 = vadd.f32 %v383, %v424
    %v435 = vadd.f32 %v388, %v424
    %v436 = vadd.f32 %v393, %v424
    %v437 = vadd.f32 %v398, %v424
    %v438 = vadd.f32 %v403, %v424
    %v439 = vadd.f32 %v408, %v424
    %v440 = vadd.f32 %v413, %v424
    %v441 = vadd.f32 %v418, %v424
    %v442 = vmul.f32 %v245, 2.0
    %v443 = vmul.f32 %v250, 2.0
    %v444 = vmul.f32 %v255, 2.0
    %v445 = vmul.f32 %v260, 2.0
    %v446 = vmul.f32 %v265, 2.0
    %v447 = vmul.f32 %v270, 2.0
    %v448 = vmul.f32 %v275, 2.0
    %v449 = vmul.f32 %v280, 2.0
    %v450 = vmul.f32 %v285, 2.0
    %v451 = vmul.f32 %v290, 2.0
    %v452 = vmul.f32 %v295, 2.0
    %v453 = vmul.f32 %v300, 2.0
    %v454 = vmul.f32 %v305, 2.0
    %v455 = vmul.f32 %v310, 2.0
    %v456 = vmul.f32 %v315, 2.0
    %v457 = vmul.f32 %v320, 2.0
    %v458 = vsub.f32 %v426, %v442
    %v459 = vsub.f32 %v427, %v443
    %v460 = vsub.f32 %v428, %v444
    %v461 = vsub.f32 %v429, %v445
    %v462 = vsub.f32 %v430, %v446
    %v463 = vsub.f32 %v431, %v447
    %v464 = vsub.f32 %v432, %v448
    %v465 = vsub.f32 %v433, %v449
    %v466 = vsub.f32 %v434, %v450
    %v467 = vsub.f32 %v435, %v451
    %v468 = vsub.f32 %v436, %v452
    %v469 = vsub.f32 %v437, %v453
    %v470 = vsub.f32 %v438, %v454
    %v471 = vsub.f32 %v439, %v455
    %v472 = vsub.f32 %v440, %v456
    %v473 = vsub.f32 %v441, %v457
    %v474 = vmax.f32 %v458, 0.0
    %v475 = vmax.f32 %v459, 0.0
    %v476 = vmax.f32 %v460, 0.0
    %v477 = vmax.f32 %v461, 0.0
    %v478 = vmax.f32 %v462, 0.0
    %v479 = vmax.f32 %v463, 0.0
    %v480 = vmax.f32 %v464, 0.0
    %v481 = vmax.f32 %v465, 0.0
    %v482 = vmax.f32 %v466, 0.0
    %v483 = vmax.f32 %v467, 0.0
    %v484 = vmax.f32 %v468, 0.0
    %v485 = vmax.f32 %v469, 0.0
    %v486 = vmax.f32 %v470, 0.0
    %v487 = vmax.f32 %v471, 0.0
    %v488 = vmax.f32 %v472, 0.0
    %v489 = vmax.f32 %v473, 0.0
    %s490 = smul.u32 %s144, 128
    %v491 = vlaneseq
    %v492 = vshrl.u32 %v491, 7
    %v493 = vadd.s32 %v492, 8
    %v494 = vadd.s32 %v492, 16
    %v495 = vadd.s32 %v492, 24
    %v496 = vadd.s32 %v492, 32
    %v497 = vadd.s32 %v492, 40
    %v498 = vadd.s32 %v492, 48
    %v499 = vadd.s32 %v492, 56
    %v500 = vadd.s32 %v492, 64
    %v501 = vadd.s32 %v492, 72
    %v502 = vadd.s32 %v492, 80
    %v503 = vadd.s32 %v492, 88
    %v504 = vadd.s32 %v492, 96
    %v505 = vadd.s32 %v492, 104
    %v506 = vadd.s32 %v492, 112
    %v507 = vadd.s32 %v492, 120
    %v508 = vstv %s490
    %v509 = vadd.s32 %v508, %v492
    %v510 = vadd.s32 %v508, %v493
    %v511 = vadd.s32 %v508, %v494
    %v512 = vadd.s32 %v508, %v495
    %v513 = vadd.s32 %v508, %v496
    %v514 = vadd.s32 %v508, %v497
    %v515 = vadd.s32 %v508, %v498
    %v516 = vadd.s32 %v508, %v499
    %v517 = vadd.s32 %v508, %v500
    %v518 = vadd.s32 %v508, %v501
    %v519 = vadd.s32 %v508, %v502
    %v520 = vadd.s32 %v508, %v503
    %v521 = vadd.s32 %v508, %v504
    %v522 = vadd.s32 %v508, %v505
    %v523 = vadd.s32 %v508, %v506
    %v524 = vadd.s32 %v508, %v507
    %s525 = smul.u32 %s145, 128
    %v526 = vlaneseq
    %v527 = vand.u32 %v526, 127
    %v528 = vstv %s525
    %v529 = vadd.s32 %v528, %v527
    %vm530 = vcmp.eq.s32.totalorder %v509, %v529
    %vm531 = vcmp.eq.s32.totalorder %v510, %v529
    %vm532 = vcmp.eq.s32.totalorder %v511, %v529
    %vm533 = vcmp.eq.s32.totalorder %v512, %v529
    %vm534 = vcmp.eq.s32.totalorder %v513, %v529
    %vm535 = vcmp.eq.s32.totalorder %v514, %v529
    %vm536 = vcmp.eq.s32.totalorder %v515, %v529
    %vm537 = vcmp.eq.s32.totalorder %v516, %v529
    %vm538 = vcmp.eq.s32.totalorder %v517, %v529
    %vm539 = vcmp.eq.s32.totalorder %v518, %v529
    %vm540 = vcmp.eq.s32.totalorder %v519, %v529
    %vm541 = vcmp.eq.s32.totalorder %v520, %v529
    %vm542 = vcmp.eq.s32.totalorder %v521, %v529
    %vm543 = vcmp.eq.s32.totalorder %v522, %v529
    %vm544 = vcmp.eq.s32.totalorder %v523, %v529
    %vm545 = vcmp.eq.s32.totalorder %v524, %v529
    %v546 = vsel %vm530, 0.0, %v474
    %v547 = vsel %vm531, 0.0, %v475
    %v548 = vsel %vm532, 0.0, %v476
    %v549 = vsel %vm533, 0.0, %v477
    %v550 = vsel %vm534, 0.0, %v478
    %v551 = vsel %vm535, 0.0, %v479
    %v552 = vsel %vm536, 0.0, %v480
    %v553 = vsel %vm537, 0.0, %v481
    %v554 = vsel %vm538, 0.0, %v482
    %v555 = vsel %vm539, 0.0, %v483
    %v556 = vsel %vm540, 0.0, %v484
    %v557 = vsel %vm541, 0.0, %v485
    %v558 = vsel %vm542, 0.0, %v486
    %v559 = vsel %vm543, 0.0, %v487
    %v560 = vsel %vm544, 0.0, %v488
    %v561 = vsel %vm545, 0.0, %v489
    %v562 = vrsqrt.pop %v546
    %v563 = vmul.f32 %v546, %v562
    %vm564 = vcmp.eq.f32.partialorder %v546, inf
    %v565 = vsel %vm564, %v546, %v563
    %vm566 = vcmp.eq.f32.partialorder %v546, 0.0
    %v567 = vand.u32 %v546, 2147483648
    %v568 = vsel %vm566, %v567, %v565
    %v569 = vrsqrt.pop %v547
    %v570 = vmul.f32 %v547, %v569
    %vm571 = vcmp.eq.f32.partialorder %v547, inf
    %v572 = vsel %vm571, %v547, %v570
    %vm573 = vcmp.eq.f32.partialorder %v547, 0.0
    %v574 = vand.u32 %v547, 2147483648
    %v575 = vsel %vm573, %v574, %v572
    %v576 = vrsqrt.pop %v548
    %v577 = vmul.f32 %v548, %v576
    %vm578 = vcmp.eq.f32.partialorder %v548, inf
    %v579 = vsel %vm578, %v548, %v577
    %vm580 = vcmp.eq.f32.partialorder %v548, 0.0
    %v581 = vand.u32 %v548, 2147483648
    %v582 = vsel %vm580, %v581, %v579
    %v583 = vrsqrt.pop %v549
    %v584 = vmul.f32 %v549, %v583
    %vm585 = vcmp.eq.f32.partialorder %v549, inf
    %v586 = vsel %vm585, %v549, %v584
    %vm587 = vcmp.eq.f32.partialorder %v549, 0.0
    %v588 = vand.u32 %v549, 2147483648
    %v589 = vsel %vm587, %v588, %v586
    %v590 = vrsqrt.pop %v550
    %v591 = vmul.f32 %v550, %v590
    %vm592 = vcmp.eq.f32.partialorder %v550, inf
    %v593 = vsel %vm592, %v550, %v591
    %vm594 = vcmp.eq.f32.partialorder %v550, 0.0
    %v595 = vand.u32 %v550, 2147483648
    %v596 = vsel %vm594, %v595, %v593
    %v597 = vrsqrt.pop %v551
    %v598 = vmul.f32 %v551, %v597
    %vm599 = vcmp.eq.f32.partialorder %v551, inf
    %v600 = vsel %vm599, %v551, %v598
    %vm601 = vcmp.eq.f32.partialorder %v551, 0.0
    %v602 = vand.u32 %v551, 2147483648
    %v603 = vsel %vm601, %v602, %v600
    %v604 = vrsqrt.pop %v552
    %v605 = vmul.f32 %v552, %v604
    %vm606 = vcmp.eq.f32.partialorder %v552, inf
    %v607 = vsel %vm606, %v552, %v605
    %vm608 = vcmp.eq.f32.partialorder %v552, 0.0
    %v609 = vand.u32 %v552, 2147483648
    %v610 = vsel %vm608, %v609, %v607
    %v611 = vrsqrt.pop %v553
    %v612 = vmul.f32 %v553, %v611
    %vm613 = vcmp.eq.f32.partialorder %v553, inf
    %v614 = vsel %vm613, %v553, %v612
    %vm615 = vcmp.eq.f32.partialorder %v553, 0.0
    %v616 = vand.u32 %v553, 2147483648
    %v617 = vsel %vm615, %v616, %v614
    %v618 = vrsqrt.pop %v554
    %v619 = vmul.f32 %v554, %v618
    %vm620 = vcmp.eq.f32.partialorder %v554, inf
    %v621 = vsel %vm620, %v554, %v619
    %vm622 = vcmp.eq.f32.partialorder %v554, 0.0
    %v623 = vand.u32 %v554, 2147483648
    %v624 = vsel %vm622, %v623, %v621
    %v625 = vrsqrt.pop %v555
    %v626 = vmul.f32 %v555, %v625
    %vm627 = vcmp.eq.f32.partialorder %v555, inf
    %v628 = vsel %vm627, %v555, %v626
    %vm629 = vcmp.eq.f32.partialorder %v555, 0.0
    %v630 = vand.u32 %v555, 2147483648
    %v631 = vsel %vm629, %v630, %v628
    %v632 = vrsqrt.pop %v556
    %v633 = vmul.f32 %v556, %v632
    %vm634 = vcmp.eq.f32.partialorder %v556, inf
    %v635 = vsel %vm634, %v556, %v633
    %vm636 = vcmp.eq.f32.partialorder %v556, 0.0
    %v637 = vand.u32 %v556, 2147483648
    %v638 = vsel %vm636, %v637, %v635
    %v639 = vrsqrt.pop %v557
    %v640 = vmul.f32 %v557, %v639
    %vm641 = vcmp.eq.f32.partialorder %v557, inf
    %v642 = vsel %vm641, %v557, %v640
    %vm643 = vcmp.eq.f32.partialorder %v557, 0.0
    %v644 = vand.u32 %v557, 2147483648
    %v645 = vsel %vm643, %v644, %v642
    %v646 = vrsqrt.pop %v558
    %v647 = vmul.f32 %v558, %v646
    %vm648 = vcmp.eq.f32.partialorder %v558, inf
    %v649 = vsel %vm648, %v558, %v647
    %vm650 = vcmp.eq.f32.partialorder %v558, 0.0
    %v651 = vand.u32 %v558, 2147483648
    %v652 = vsel %vm650, %v651, %v649
    %v653 = vrsqrt.pop %v559
    %v654 = vmul.f32 %v559, %v653
    %vm655 = vcmp.eq.f32.partialorder %v559, inf
    %v656 = vsel %vm655, %v559, %v654
    %vm657 = vcmp.eq.f32.partialorder %v559, 0.0
    %v658 = vand.u32 %v559, 2147483648
    %v659 = vsel %vm657, %v658, %v656
    %v660 = vrsqrt.pop %v560
    %v661 = vmul.f32 %v560, %v660
    %vm662 = vcmp.eq.f32.partialorder %v560, inf
    %v663 = vsel %vm662, %v560, %v661
    %vm664 = vcmp.eq.f32.partialorder %v560, 0.0
    %v665 = vand.u32 %v560, 2147483648
    %v666 = vsel %vm664, %v665, %v663
    %v667 = vrsqrt.pop %v561
    %v668 = vmul.f32 %v561, %v667
    %vm669 = vcmp.eq.f32.partialorder %v561, inf
    %v670 = vsel %vm669, %v561, %v668
    %vm671 = vcmp.eq.f32.partialorder %v561, 0.0
    %v672 = vand.u32 %v561, 2147483648
    %v673 = vsel %vm671, %v672, %v670
    %v674 = vadd.f32 %v568, 1e-08
    %v675 = vadd.f32 %v575, 1e-08
    %v676 = vadd.f32 %v582, 1e-08
    %v677 = vadd.f32 %v589, 1e-08
    %v678 = vadd.f32 %v596, 1e-08
    %v679 = vadd.f32 %v603, 1e-08
    %v680 = vadd.f32 %v610, 1e-08
    %v681 = vadd.f32 %v617, 1e-08
    %v682 = vadd.f32 %v624, 1e-08
    %v683 = vadd.f32 %v631, 1e-08
    %v684 = vadd.f32 %v638, 1e-08
    %v685 = vadd.f32 %v645, 1e-08
    %v686 = vadd.f32 %v652, 1e-08
    %v687 = vadd.f32 %v659, 1e-08
    %v688 = vadd.f32 %v666, 1e-08
    %v689 = vadd.f32 %v673, 1e-08
    %v690 = vld [vmem:[%s136] sm:$0xff]
    %v691 = vld [vmem:[%s136 + $0x8] sm:$0xff]
    %v692 = vld [vmem:[%s136 + $0x10] sm:$0xff]
    %v693 = vld [vmem:[%s136 + $0x18] sm:$0xff]
    %v694 = vld [vmem:[%s136 + $0x20] sm:$0xff]
    %v695 = vld [vmem:[%s136 + $0x28] sm:$0xff]
    %v696 = vld [vmem:[%s136 + $0x30] sm:$0xff]
    %v697 = vld [vmem:[%s136 + $0x38] sm:$0xff]
    %v698 = vld [vmem:[%s136 + $0x40] sm:$0xff]
    %v699 = vld [vmem:[%s136 + $0x48] sm:$0xff]
    %v700 = vld [vmem:[%s136 + $0x50] sm:$0xff]
    %v701 = vld [vmem:[%s136 + $0x58] sm:$0xff]
    %v702 = vld [vmem:[%s136 + $0x60] sm:$0xff]
    %v703 = vld [vmem:[%s136 + $0x68] sm:$0xff]
    %v704 = vld [vmem:[%s136 + $0x70] sm:$0xff]
    %v705 = vld [vmem:[%s136 + $0x78] sm:$0xff]
    %v706 = vld [vmem:[%s142] sm:$0x1]
    %707 = vset.pattern.permute.xlu0 0
    %708 = vperm.xlu0 %707, %v690
    %v709 = vpop.permute.xlu0 %708
    %710 = vset.pattern.permute.xlu0 0
    %711 = vperm.xlu0 %710, %v691
    %v712 = vpop.permute.xlu0 %711
    %713 = vset.pattern.permute.xlu0 0
    %714 = vperm.xlu0 %713, %v692
    %v715 = vpop.permute.xlu0 %714
    %716 = vset.pattern.permute.xlu0 0
    %717 = vperm.xlu0 %716, %v693
    %v718 = vpop.permute.xlu0 %717
    %719 = vset.pattern.permute.xlu0 0
    %720 = vperm.xlu0 %719, %v694
    %v721 = vpop.permute.xlu0 %720
    %722 = vset.pattern.permute.xlu0 0
    %723 = vperm.xlu0 %722, %v695
    %v724 = vpop.permute.xlu0 %723
    %725 = vset.pattern.permute.xlu0 0
    %726 = vperm.xlu0 %725, %v696
    %v727 = vpop.permute.xlu0 %726
    %728 = vset.pattern.permute.xlu0 0
    %729 = vperm.xlu0 %728, %v697
    %v730 = vpop.permute.xlu0 %729
    %731 = vset.pattern.permute.xlu0 0
    %732 = vperm.xlu0 %731, %v698
    %v733 = vpop.permute.xlu0 %732
    %734 = vset.pattern.permute.xlu0 0
    %735 = vperm.xlu0 %734, %v699
    %v736 = vpop.permute.xlu0 %735
    %737 = vset.pattern.permute.xlu0 0
    %738 = vperm.xlu0 %737, %v700
    %v739 = vpop.permute.xlu0 %738
    %740 = vset.pattern.permute.xlu0 0
    %741 = vperm.xlu0 %740, %v701
    %v742 = vpop.permute.xlu0 %741
    %743 = vset.pattern.permute.xlu0 0
    %744 = vperm.xlu0 %743, %v702
    %v745 = vpop.permute.xlu0 %744
    %746 = vset.pattern.permute.xlu0 0
    %747 = vperm.xlu0 %746, %v703
    %v748 = vpop.permute.xlu0 %747
    %749 = vset.pattern.permute.xlu0 0
    %750 = vperm.xlu0 %749, %v704
    %v751 = vpop.permute.xlu0 %750
    %752 = vset.pattern.permute.xlu0 0
    %753 = vperm.xlu0 %752, %v705
    %v754 = vpop.permute.xlu0 %753
    %v755 = vlaneseq
    %v756 = vshrl.u32 %v755, 7
    %v757 = vsub.s32 0, %v756
    %v758 = vrot.slane %v706, %v757
    %vm759 = vcmp.eq.s32.totalorder %v709, %v758
    %vm760 = vcmp.eq.s32.totalorder %v712, %v758
    %vm761 = vcmp.eq.s32.totalorder %v715, %v758
    %vm762 = vcmp.eq.s32.totalorder %v718, %v758
    %vm763 = vcmp.eq.s32.totalorder %v721, %v758
    %vm764 = vcmp.eq.s32.totalorder %v724, %v758
    %vm765 = vcmp.eq.s32.totalorder %v727, %v758
    %vm766 = vcmp.eq.s32.totalorder %v730, %v758
    %vm767 = vcmp.eq.s32.totalorder %v733, %v758
    %vm768 = vcmp.eq.s32.totalorder %v736, %v758
    %vm769 = vcmp.eq.s32.totalorder %v739, %v758
    %vm770 = vcmp.eq.s32.totalorder %v742, %v758
    %vm771 = vcmp.eq.s32.totalorder %v745, %v758
    %vm772 = vcmp.eq.s32.totalorder %v748, %v758
    %vm773 = vcmp.eq.s32.totalorder %v751, %v758
    %vm774 = vcmp.eq.s32.totalorder %v754, %v758
    %vm775 = vcmp.lt.s32.totalorder %v509, 8
    %vm776 = vcmp.lt.s32.totalorder %v510, 8
    %vm777 = vcmp.lt.s32.totalorder %v511, 8
    %vm778 = vcmp.lt.s32.totalorder %v512, 8
    %vm779 = vcmp.lt.s32.totalorder %v513, 8
    %vm780 = vcmp.lt.s32.totalorder %v514, 8
    %vm781 = vcmp.lt.s32.totalorder %v515, 8
    %vm782 = vcmp.lt.s32.totalorder %v516, 8
    %vm783 = vcmp.lt.s32.totalorder %v517, 8
    %vm784 = vcmp.lt.s32.totalorder %v518, 8
    %vm785 = vcmp.lt.s32.totalorder %v519, 8
    %vm786 = vcmp.lt.s32.totalorder %v520, 8
    %vm787 = vcmp.lt.s32.totalorder %v521, 8
    %vm788 = vcmp.lt.s32.totalorder %v522, 8
    %vm789 = vcmp.lt.s32.totalorder %v523, 8
    %vm790 = vcmp.lt.s32.totalorder %v524, 8
    %vm791 = vcmp.lt.s32.totalorder %v529, 8
    %vm792 = vmand %vm775, %vm791
    %vm793 = vmand %vm776, %vm791
    %vm794 = vmand %vm777, %vm791
    %vm795 = vmand %vm778, %vm791
    %vm796 = vmand %vm779, %vm791
    %vm797 = vmand %vm780, %vm791
    %vm798 = vmand %vm781, %vm791
    %vm799 = vmand %vm782, %vm791
    %vm800 = vmand %vm783, %vm791
    %vm801 = vmand %vm784, %vm791
    %vm802 = vmand %vm785, %vm791
    %vm803 = vmand %vm786, %vm791
    %vm804 = vmand %vm787, %vm791
    %vm805 = vmand %vm788, %vm791
    %vm806 = vmand %vm789, %vm791
    %vm807 = vmand %vm790, %vm791
    %vm808 = vmand %vm759, %vm792
    %vm809 = vmand %vm760, %vm793
    %vm810 = vmand %vm761, %vm794
    %vm811 = vmand %vm762, %vm795
    %vm812 = vmand %vm763, %vm796
    %vm813 = vmand %vm764, %vm797
    %vm814 = vmand %vm765, %vm798
    %vm815 = vmand %vm766, %vm799
    %vm816 = vmand %vm767, %vm800
    %vm817 = vmand %vm768, %vm801
    %vm818 = vmand %vm769, %vm802
    %vm819 = vmand %vm770, %vm803
    %vm820 = vmand %vm771, %vm804
    %vm821 = vmand %vm772, %vm805
    %vm822 = vmand %vm773, %vm806
    %vm823 = vmand %vm774, %vm807
    %v824 = vsel %vm808, 1, 0
    %v825 = vsel %vm809, 1, 0
    %v826 = vsel %vm810, 1, 0
    %v827 = vsel %vm811, 1, 0
    %v828 = vsel %vm812, 1, 0
    %v829 = vsel %vm813, 1, 0
    %v830 = vsel %vm814, 1, 0
    %v831 = vsel %vm815, 1, 0
    %v832 = vsel %vm816, 1, 0
    %v833 = vsel %vm817, 1, 0
    %v834 = vsel %vm818, 1, 0
    %v835 = vsel %vm819, 1, 0
    %v836 = vsel %vm820, 1, 0
    %v837 = vsel %vm821, 1, 0
    %v838 = vsel %vm822, 1, 0
    %v839 = vsel %vm823, 1, 0
    %v840 = vcvt.s32.f32 %v824
    %v841 = vcvt.s32.f32 %v825
    %v842 = vcvt.s32.f32 %v826
    %v843 = vcvt.s32.f32 %v827
    %v844 = vcvt.s32.f32 %v828
    %v845 = vcvt.s32.f32 %v829
    %v846 = vcvt.s32.f32 %v830
    %v847 = vcvt.s32.f32 %v831
    %v848 = vcvt.s32.f32 %v832
    %v849 = vcvt.s32.f32 %v833
    %v850 = vcvt.s32.f32 %v834
    %v851 = vcvt.s32.f32 %v835
    %v852 = vcvt.s32.f32 %v836
    %v853 = vcvt.s32.f32 %v837
    %v854 = vcvt.s32.f32 %v838
    %v855 = vcvt.s32.f32 %v839
    %v856 = vsel %vm792, 1, 0
    %v857 = vsel %vm793, 1, 0
    %v858 = vsel %vm794, 1, 0
    %v859 = vsel %vm795, 1, 0
    %v860 = vsel %vm796, 1, 0
    %v861 = vsel %vm797, 1, 0
    %v862 = vsel %vm798, 1, 0
    %v863 = vsel %vm799, 1, 0
    %v864 = vsel %vm800, 1, 0
    %v865 = vsel %vm801, 1, 0
    %v866 = vsel %vm802, 1, 0
    %v867 = vsel %vm803, 1, 0
    %v868 = vsel %vm804, 1, 0
    %v869 = vsel %vm805, 1, 0
    %v870 = vsel %vm806, 1, 0
    %v871 = vsel %vm807, 1, 0
    %v872 = vcvt.s32.f32 %v856
    %v873 = vcvt.s32.f32 %v857
    %v874 = vcvt.s32.f32 %v858
    %v875 = vcvt.s32.f32 %v859
    %v876 = vcvt.s32.f32 %v860
    %v877 = vcvt.s32.f32 %v861
    %v878 = vcvt.s32.f32 %v862
    %v879 = vcvt.s32.f32 %v863
    %v880 = vcvt.s32.f32 %v864
    %v881 = vcvt.s32.f32 %v865
    %v882 = vcvt.s32.f32 %v866
    %v883 = vcvt.s32.f32 %v867
    %v884 = vcvt.s32.f32 %v868
    %v885 = vcvt.s32.f32 %v869
    %v886 = vcvt.s32.f32 %v870
    %v887 = vcvt.s32.f32 %v871
    %v888 = vsub.f32 %v872, %v840
    %v889 = vsub.f32 %v873, %v841
    %v890 = vsub.f32 %v874, %v842
    %v891 = vsub.f32 %v875, %v843
    %v892 = vsub.f32 %v876, %v844
    %v893 = vsub.f32 %v877, %v845
    %v894 = vsub.f32 %v878, %v846
    %v895 = vsub.f32 %v879, %v847
    %v896 = vsub.f32 %v880, %v848
    %v897 = vsub.f32 %v881, %v849
    %v898 = vsub.f32 %v882, %v850
    %v899 = vsub.f32 %v883, %v851
    %v900 = vsub.f32 %v884, %v852
    %v901 = vsub.f32 %v885, %v853
    %v902 = vsub.f32 %v886, %v854
    %v903 = vsub.f32 %v887, %v855
    %v904 = vsub.f32 0.2, %v674
    %v905 = vsub.f32 0.2, %v675
    %v906 = vsub.f32 0.2, %v676
    %v907 = vsub.f32 0.2, %v677
    %v908 = vsub.f32 0.2, %v678
    %v909 = vsub.f32 0.2, %v679
    %v910 = vsub.f32 0.2, %v680
    %v911 = vsub.f32 0.2, %v681
    %v912 = vsub.f32 0.2, %v682
    %v913 = vsub.f32 0.2, %v683
    %v914 = vsub.f32 0.2, %v684
    %v915 = vsub.f32 0.2, %v685
    %v916 = vsub.f32 0.2, %v686
    %v917 = vsub.f32 0.2, %v687
    %v918 = vsub.f32 0.2, %v688
    %v919 = vsub.f32 0.2, %v689
    %v920 = vmax.f32 %v904, 0.0
    %v921 = vmax.f32 %v905, 0.0
    %v922 = vmax.f32 %v906, 0.0
    %v923 = vmax.f32 %v907, 0.0
    %v924 = vmax.f32 %v908, 0.0
    %v925 = vmax.f32 %v909, 0.0
    %v926 = vmax.f32 %v910, 0.0
    %v927 = vmax.f32 %v911, 0.0
    %v928 = vmax.f32 %v912, 0.0
    %v929 = vmax.f32 %v913, 0.0
    %v930 = vmax.f32 %v914, 0.0
    %v931 = vmax.f32 %v915, 0.0
    %v932 = vmax.f32 %v916, 0.0
    %v933 = vmax.f32 %v917, 0.0
    %v934 = vmax.f32 %v918, 0.0
    %v935 = vmax.f32 %v919, 0.0
    %p936 = scmp.eq.s32.totalorder %s144, %s145
    %s937 = scalar_select %p936, 1.0, 2.0
    %v938 = vmul.f32 %v674, %v674
    %v939 = vmul.f32 %v675, %v675
    %v940 = vmul.f32 %v676, %v676
    %v941 = vmul.f32 %v677, %v677
    %v942 = vmul.f32 %v678, %v678
    %v943 = vmul.f32 %v679, %v679
    %v944 = vmul.f32 %v680, %v680
    %v945 = vmul.f32 %v681, %v681
    %v946 = vmul.f32 %v682, %v682
    %v947 = vmul.f32 %v683, %v683
    %v948 = vmul.f32 %v684, %v684
    %v949 = vmul.f32 %v685, %v685
    %v950 = vmul.f32 %v686, %v686
    %v951 = vmul.f32 %v687, %v687
    %v952 = vmul.f32 %v688, %v688
    %v953 = vmul.f32 %v689, %v689
    %v954 = vmul.f32 %v840, %v938
    %v955 = vmul.f32 %v841, %v939
    %v956 = vmul.f32 %v842, %v940
    %v957 = vmul.f32 %v843, %v941
    %v958 = vmul.f32 %v844, %v942
    %v959 = vmul.f32 %v845, %v943
    %v960 = vmul.f32 %v846, %v944
    %v961 = vmul.f32 %v847, %v945
    %v962 = vmul.f32 %v848, %v946
    %v963 = vmul.f32 %v849, %v947
    %v964 = vmul.f32 %v850, %v948
    %v965 = vmul.f32 %v851, %v949
    %v966 = vmul.f32 %v852, %v950
    %v967 = vmul.f32 %v853, %v951
    %v968 = vmul.f32 %v854, %v952
    %v969 = vmul.f32 %v855, %v953
    %v970 = vadd.f32 %v954, %v955
    %v971 = vadd.f32 %v970, %v956
    %v972 = vadd.f32 %v971, %v957
    %v973 = vadd.f32 %v972, %v958
    %v974 = vadd.f32 %v973, %v959
    %v975 = vadd.f32 %v974, %v960
    %v976 = vadd.f32 %v975, %v961
    %v977 = vadd.f32 %v976, %v962
    %v978 = vadd.f32 %v977, %v963
    %v979 = vadd.f32 %v978, %v964
    %v980 = vadd.f32 %v979, %v965
    %v981 = vadd.f32 %v980, %v966
    %v982 = vadd.f32 %v981, %v967
    %v983 = vadd.f32 %v982, %v968
    %v984 = vadd.f32 %v983, %v969
    %985 = vadd.xlane.f32.xlu0 %v984
    %v986 = vpop.xlane.xlu0 %985
    %v987 = vrot.slane %v986, 4
    %v988 = vadd.f32 %v986, %v987
    %v989 = vrot.slane %v988, 2
    %v990 = vadd.f32 %v988, %v989
    %v991 = vrot.slane %v990, 1
    %v992 = vadd.f32 %v990, %v991
    %s993 = vtos %v992
    %v994 = vstv %s993
    %v995 = vstv %s937
    %v996 = vmul.f32 %v994, %v995
    %v997 = vmul.f32 %v920, %v920
    %v998 = vmul.f32 %v921, %v921
    %v999 = vmul.f32 %v922, %v922
    %v1000 = vmul.f32 %v923, %v923
    %v1001 = vmul.f32 %v924, %v924
    %v1002 = vmul.f32 %v925, %v925
    %v1003 = vmul.f32 %v926, %v926
    %v1004 = vmul.f32 %v927, %v927
    %v1005 = vmul.f32 %v928, %v928
    %v1006 = vmul.f32 %v929, %v929
    %v1007 = vmul.f32 %v930, %v930
    %v1008 = vmul.f32 %v931, %v931
    %v1009 = vmul.f32 %v932, %v932
    %v1010 = vmul.f32 %v933, %v933
    %v1011 = vmul.f32 %v934, %v934
    %v1012 = vmul.f32 %v935, %v935
    %v1013 = vmul.f32 %v888, %v997
    %v1014 = vmul.f32 %v889, %v998
    %v1015 = vmul.f32 %v890, %v999
    %v1016 = vmul.f32 %v891, %v1000
    %v1017 = vmul.f32 %v892, %v1001
    %v1018 = vmul.f32 %v893, %v1002
    %v1019 = vmul.f32 %v894, %v1003
    %v1020 = vmul.f32 %v895, %v1004
    %v1021 = vmul.f32 %v896, %v1005
    %v1022 = vmul.f32 %v897, %v1006
    %v1023 = vmul.f32 %v898, %v1007
    %v1024 = vmul.f32 %v899, %v1008
    %v1025 = vmul.f32 %v900, %v1009
    %v1026 = vmul.f32 %v901, %v1010
    %v1027 = vmul.f32 %v902, %v1011
    %v1028 = vmul.f32 %v903, %v1012
    %v1029 = vadd.f32 %v1013, %v1014
    %v1030 = vadd.f32 %v1029, %v1015
    %v1031 = vadd.f32 %v1030, %v1016
    %v1032 = vadd.f32 %v1031, %v1017
    %v1033 = vadd.f32 %v1032, %v1018
    %v1034 = vadd.f32 %v1033, %v1019
    %v1035 = vadd.f32 %v1034, %v1020
    %v1036 = vadd.f32 %v1035, %v1021
    %v1037 = vadd.f32 %v1036, %v1022
    %v1038 = vadd.f32 %v1037, %v1023
    %v1039 = vadd.f32 %v1038, %v1024
    %v1040 = vadd.f32 %v1039, %v1025
    %v1041 = vadd.f32 %v1040, %v1026
    %v1042 = vadd.f32 %v1041, %v1027
    %v1043 = vadd.f32 %v1042, %v1028
    %1044 = vadd.xlane.f32.xlu0 %v1043
    %v1045 = vpop.xlane.xlu0 %1044
    %v1046 = vrot.slane %v1045, 4
    %v1047 = vadd.f32 %v1045, %v1046
    %v1048 = vrot.slane %v1047, 2
    %v1049 = vadd.f32 %v1047, %v1048
    %v1050 = vrot.slane %v1049, 1
    %v1051 = vadd.f32 %v1049, %v1050
    %s1052 = vtos %v1051
    %v1053 = vstv %s1052
    %v1054 = vmul.f32 %v1053, %v995
    %v1055 = vadd.f32 %v840, %v841
    %v1056 = vadd.f32 %v1055, %v842
    %v1057 = vadd.f32 %v1056, %v843
    %v1058 = vadd.f32 %v1057, %v844
    %v1059 = vadd.f32 %v1058, %v845
    %v1060 = vadd.f32 %v1059, %v846
    %v1061 = vadd.f32 %v1060, %v847
    %v1062 = vadd.f32 %v1061, %v848
    %v1063 = vadd.f32 %v1062, %v849
    %v1064 = vadd.f32 %v1063, %v850
    %v1065 = vadd.f32 %v1064, %v851
    %v1066 = vadd.f32 %v1065, %v852
    %v1067 = vadd.f32 %v1066, %v853
    %v1068 = vadd.f32 %v1067, %v854
    %v1069 = vadd.f32 %v1068, %v855
    %1070 = vadd.xlane.f32.xlu0 %v1069
    %v1071 = vpop.xlane.xlu0 %1070
    %v1072 = vrot.slane %v1071, 4
    %v1073 = vadd.f32 %v1071, %v1072
    %v1074 = vrot.slane %v1073, 2
    %v1075 = vadd.f32 %v1073, %v1074
    %v1076 = vrot.slane %v1075, 1
    %v1077 = vadd.f32 %v1075, %v1076
    %s1078 = vtos %v1077
    %v1079 = vstv %s1078
    %v1080 = vmul.f32 %v1079, %v995
    %vm1081 = vcmp.eq.s32.totalorder %v492, 0
    %vm1082 = vcmp.eq.s32.totalorder %v527, 0
    %vm1083 = vmand %vm1081, %vm1082
    %v1084 = vsel %vm1083, 1, 0
    %v1085 = vcvt.s32.f32 %v1084
    %vm1086 = vcmp.eq.s32.totalorder %v527, 1
    %vm1087 = vmand %vm1081, %vm1086
    %v1088 = vsel %vm1087, 1, 0
    %v1089 = vcvt.s32.f32 %v1088
    %vm1090 = vcmp.eq.s32.totalorder %v527, 2
    %vm1091 = vmand %vm1081, %vm1090
    %v1092 = vsel %vm1091, 1, 0
    %v1093 = vcvt.s32.f32 %v1092
    %v1094 = vmul.f32 %v1085, %v996
    %v1095 = vmul.f32 %v1089, %v1054
    %v1096 = vadd.f32 %v1094, %v1095
    %v1097 = vmul.f32 %v1093, %v1080
    %v1098 = vadd.f32 %v1096, %v1097
    %1099 = vst [vmem:[#allocation5] sm:$0xff] %v1098
    // Predicated region
    $region26: #{tpu_custom_call.1} parent=1 // pred_check
      _
    $region27: #{tpu_custom_call.1} parent=1 // pred_check_branch
      %1101 = sbr.rel (0) target = $region29
    $region28: #{tpu_custom_call.1} parent=1 // pred_region
      %s1103 = ssub.s32 128, 128
      %1104 = vsyncadd [#allocation6], %s1103
      %s1106 = sshll.u32 [#allocation5], 4
      %s1107 = int_to_ptr.vmem [resolvable:$true] %s1106
      %1109 = dma.vmem_to_hbm [thread:$0]  %s1107, 128, %s8, [#allocation6]
    $region29: #{tpu_custom_call.1} parent=1 // pred_fallthru
      _
    // Predicated region
    $region30: #{tpu_custom_call.1} parent=1 // pred_check
      _
    $region31: #{tpu_custom_call.1} parent=1 // pred_check_branch
      %1111 = sbr.rel (0) target = $region33
    $region32: #{tpu_custom_call.1} parent=1 // pred_region
      %1112 = dma.done [#allocation6], 128
    $region33: #{tpu_custom_call.1} parent=1 // pred_fallthru
      _
    %1113 = vsyncpa [#allocation6], 1

</llo_original>
